<compile_context>
chip_gen: v7x
topology: tpu7x:2x2x1
jax: 0.10.0
libtpu: 0.0.40
codegen_flags: <defaults>
</compile_context>

<pallas_src>
import jax
import jax.numpy as jnp
from jax.experimental import pallas as pl
from jax.experimental.pallas import tpu as pltpu


def _round_up(x: int, m: int) -> int:
    return ((x + m - 1) // m) * m


def _square_matmul_kernel(mat_ref, x_ref, o_ref, acc_ref):
    # Zero the resident accumulator at the start of the K loop.
    @pl.when(pl.program_id(2) == 0)
    def _():
        acc_ref[...] = jnp.zeros_like(acc_ref)

    # MXU matmul for this (tm, tk) x (tk, tn) tile pair, f32 accumulation.
    acc_ref[...] += jnp.dot(
        mat_ref[...], x_ref[...], preferred_element_type=jnp.float32
    )

    # Write the output tile only once, on the last K step.
    @pl.when(pl.program_id(2) == pl.num_programs(2) - 1)
    def _():
        o_ref[...] = acc_ref[...].astype(o_ref.dtype)


def square_matrix_multiplication(
    mat: jax.Array,
    x: jax.Array,
    *,
    tm: int = 512,
    tn: int = 512,
    tk: int = 512,
    cast_inputs_to_bf16: bool = False,
) -> jax.Array:
    """Pallas equivalent of SquareMatrixMultiplicationLayer.forward.

    mat: (N, N) float32 square parameter matrix
    x:   (1, 1, N, M) float32 (only x[0, 0] is used, like the torch module)
    returns: (1, 1, N, M) float32 = (mat @ x[0, 0])[None, None]
    """
    assert mat.ndim == 2 and mat.shape[0] == mat.shape[1], "mat must be square"
    # Glue: drop the leading singleton batch/channel dims in the wrapper so the
    # kernel sees a lane-dense (K, M) slab (last dim maps to lanes).
    x2d = x[0, 0]
    N, M = x2d.shape
    K = N
    assert mat.shape[1] == K

    # Clamp tile sizes to the (padded) problem size; keep MXU/lane alignment:
    # tm, tk, tn all multiples of 128 (>= (8, 128) layout minimum).
    tm = min(tm, _round_up(N, 128))
    tk = min(tk, _round_up(K, 128))
    tn = min(tn, _round_up(M, 128))

    # Pad operands to tile multiples (zero padding along K is exact; padded
    # output rows/cols are sliced away below).
    Np = _round_up(N, tm)
    Kp = _round_up(K, tk)
    Mp = _round_up(M, tn)

    mat_p = mat
    if (Np, Kp) != (N, K):
        mat_p = jnp.pad(mat, ((0, Np - N), (0, Kp - K)))
    x_p = x2d
    if (Kp, Mp) != (K, M):
        x_p = jnp.pad(x2d, ((0, Kp - K), (0, Mp - M)))

    if cast_inputs_to_bf16:
        # Optional: halve HBM/VMEM traffic and use bf16 MXU passes on v6e/v7x;
        # accumulation stays f32 inside the kernel.
        mat_p = mat_p.astype(jnp.bfloat16)
        x_p = x_p.astype(jnp.bfloat16)

    grid = (Np // tm, Mp // tn, Kp // tk)  # (i, j, k) — reduction axis last

    cost = pl.CostEstimate(
        flops=2 * N * K * M,
        transcendentals=0,
        bytes_accessed=4 * (N * K + K * M + N * M),
    )

    y2d = pl.pallas_call(
        _square_matmul_kernel,
        out_shape=jax.ShapeDtypeStruct((Np, Mp), jnp.float32),
        grid_spec=pltpu.PrefetchScalarGridSpec(
            num_scalar_prefetch=0,
            grid=grid,
            in_specs=[
                pl.BlockSpec((tm, tk), lambda i, j, k: (i, k)),  # mat tile
                pl.BlockSpec((tk, tn), lambda i, j, k: (k, j)),  # x tile
            ],
            # Output index independent of k -> accumulator tile stays resident
            # across the K loop; HBM writeback happens once per (i, j) tile.
            out_specs=pl.BlockSpec((tm, tn), lambda i, j, k: (i, j)),
            scratch_shapes=[pltpu.VMEM((tm, tn), jnp.float32)],
        ),
        compiler_params=pltpu.CompilerParams(
            dimension_semantics=("parallel", "parallel", "arbitrary"),
        ),
        cost_estimate=cost,
    )(mat_p, x_p)

    if (Np, Mp) != (N, M):
        y2d = y2d[:N, :M]

    # Glue: re-attach the two leading singleton dims (unsqueeze(0).unsqueeze(0)).
    return y2d[None, None, ...]


if __name__ == "__main__":
    # Small shapes consistent with the module: mat is (N, N), x is (1, 1, N, M).
    # Tiles of 128 are passed explicitly so the (i, j, k) pipeline/accumulator
    # path is actually exercised (grid = (2, 3, 2)) even at this small size.
    N, M = 256, 384
    key = jax.random.PRNGKey(0)
    k_mat, k_x = jax.random.split(key)

    mat = jax.random.normal(k_mat, (N, N), dtype=jnp.float32)
    x = jax.random.normal(k_x, (1, 1, N, M), dtype=jnp.float32)

    y = square_matrix_multiplication(mat, x, tm=128, tn=128, tk=128)
    y = jax.block_until_ready(y)

    # Reference check against plain JAX (same semantics as the torch module).
    y_ref = (mat @ x[0, 0])[None, None, ...]
    assert y.shape == (1, 1, N, M)
    assert jnp.allclose(y, y_ref, atol=1e-4, rtol=1e-4)

    print("KERNEL_OK")
</pallas_src>

<mosaic_0001>
module attributes {stable_mosaic.version = 11 : i64} {
  func.func @_square_matmul_kernel(%arg0: i32, %arg1: i32, %arg2: i32, %arg3: memref<128x128xf32, #tpu.memory_space<vmem>>, %arg4: memref<128x128xf32, #tpu.memory_space<vmem>>, %arg5: memref<128x128xf32, #tpu.memory_space<vmem>>, %arg6: memref<128x128xf32, #tpu.memory_space<vmem>>) attributes {dimension_semantics = [#tpu.dimension_semantics<parallel>, #tpu.dimension_semantics<parallel>, #tpu.dimension_semantics<arbitrary>], iteration_bounds = array<i64: 2, 3, 2>, scalar_prefetch = 0 : i64, scratch_operands = 1 : i64, tpu.core_type = #tpu.core_type<tc>, window_params = [{transform_indices = @transform_0, window_bounds = array<i64: 128, 128>}, {transform_indices = @transform_1, window_bounds = array<i64: 128, 128>}, {transform_indices = @transform_2, window_bounds = array<i64: 128, 128>}]} {
    %c0_i32 = arith.constant 0 : i32
    %0 = arith.cmpi eq, %arg2, %c0_i32 : i32
    %1 = arith.extui %0 : i1 to i32
    %c0_i32_0 = arith.constant 0 : i32
    %2 = arith.cmpi ne, %1, %c0_i32_0 : i32
    scf.if %2 {
      %cst_9 = arith.constant 0.000000e+00 : f32
      %12 = vector.broadcast %cst_9 : f32 to vector<128x128xf32>
      %c0_10 = arith.constant 0 : index
      %c0_11 = arith.constant 0 : index
      %13 = vector.load %arg6[%c0_10, %c0_11] : memref<128x128xf32, #tpu.memory_space<vmem>>, vector<128x128xf32>
      tpu.vector_store %arg6[%c0_10, %c0_11], %12 {strides = array<i32>} : memref<128x128xf32, #tpu.memory_space<vmem>>, vector<128x128xf32>,
    } else {
    }
    %c0 = arith.constant 0 : index
    %c0_1 = arith.constant 0 : index
    %3 = vector.load %arg6[%c0, %c0_1] : memref<128x128xf32, #tpu.memory_space<vmem>>, vector<128x128xf32>
    %c0_2 = arith.constant 0 : index
    %c0_3 = arith.constant 0 : index
    %4 = vector.load %arg3[%c0_2, %c0_3] : memref<128x128xf32, #tpu.memory_space<vmem>>, vector<128x128xf32>
    %c0_4 = arith.constant 0 : index
    %c0_5 = arith.constant 0 : index
    %5 = vector.load %arg4[%c0_4, %c0_5] : memref<128x128xf32, #tpu.memory_space<vmem>>, vector<128x128xf32>
    %cst = arith.constant dense<0.000000e+00> : vector<128x128xf32>
    %6 = tpu.matmul %4, %5, %cst {dimension_numbers = #tpu.dot_dimension_numbers<[1], [0], [0], [1], [0, 0, 1, 1], [], []>} : vector<128x128xf32>, vector<128x128xf32>, vector<128x128xf32> -> vector<128x128xf32>
    %7 = arith.addf %3, %6 : vector<128x128xf32>
    %c0_6 = arith.constant 0 : index
    %c0_7 = arith.constant 0 : index
    %8 = vector.load %arg6[%c0_6, %c0_7] : memref<128x128xf32, #tpu.memory_space<vmem>>, vector<128x128xf32>
    tpu.vector_store %arg6[%c0_6, %c0_7], %7 {strides = array<i32>} : memref<128x128xf32, #tpu.memory_space<vmem>>, vector<128x128xf32>,
    %c1_i32 = arith.constant 1 : i32
    %9 = arith.cmpi eq, %arg2, %c1_i32 : i32
    %10 = arith.extui %9 : i1 to i32
    %c0_i32_8 = arith.constant 0 : i32
    %11 = arith.cmpi ne, %10, %c0_i32_8 : i32
    scf.if %11 {
      %c0_9 = arith.constant 0 : index
      %c0_10 = arith.constant 0 : index
      %12 = vector.load %arg6[%c0_9, %c0_10] : memref<128x128xf32, #tpu.memory_space<vmem>>, vector<128x128xf32>
      %c0_11 = arith.constant 0 : index
      %c0_12 = arith.constant 0 : index
      %13 = vector.load %arg5[%c0_11, %c0_12] : memref<128x128xf32, #tpu.memory_space<vmem>>, vector<128x128xf32>
      tpu.vector_store %arg5[%c0_11, %c0_12], %12 {strides = array<i32>} : memref<128x128xf32, #tpu.memory_space<vmem>>, vector<128x128xf32>,
    } else {
    }
    return
  }
  func.func @transform_0(%arg0: i32, %arg1: i32, %arg2: i32) -> (i32, i32) {
    %c0_i32 = arith.constant 0 : i32
    return %arg0, %arg2 : i32, i32
  }
  func.func @transform_1(%arg0: i32, %arg1: i32, %arg2: i32) -> (i32, i32) {
    %c0_i32 = arith.constant 0 : i32
    return %arg2, %arg1 : i32, i32
  }
  func.func @transform_2(%arg0: i32, %arg1: i32, %arg2: i32) -> (i32, i32) {
    %c0_i32 = arith.constant 0 : i32
    return %arg0, %arg1 : i32, i32
  }
}

</mosaic_0001>

<llo_original>
// kernel: tpu_custom_call.1
$region0: #{tpu_custom_call.1}
  #allocation0 [shape = 'u32[]', space=smem, size = 0x4, offset = 0x4, fixed_abs, tag = 'smem constant byte address 0x4 - core index']
  #allocation1 [shape = 'u32[144,128]{1,0:T(1,128)}', space=vmem, size = 0x12000, scoped, tag = 'internal scratch']
  #allocation2 [shape = 'f32[128,128]{1,0:T(8,128)}', space=vmem, size = 0x10000, scoped, tag = 'scratch operand']
  %s0 = inlined_call_operand.hbm [shape: f32[256,256], index: 0, kind: input, shape index: {}]
  %s1 = inlined_call_operand.hbm [shape: f32[256,384], index: 1, kind: input, shape index: {}]
  %s2 = inlined_call_operand.hbm [shape: f32[256,384], index: 2, kind: output, shape index: {}]
  %s3 = sld [smem:[#allocation0]]
  $region57: #{tpu_custom_call.1} parent=0
    _
  %s5 = ssub.s32 1, %s3
  %s6 = scalar_select 0, %s5, %s3
  $region1: #{tpu_custom_call.1} parent=0
    #allocation3 [shape = 'u8[131072]{0}', space=vmem, size = 0x20000, scoped, tag = 'input window, operand 0']
    #allocation4 [shape = 's32[2]{0}', space=sflag, size = 0x8, scoped, tag = 'scoped memory for tpu_custom_call.1']
    #allocation5 [shape = 's32[2]{0}', space=sflag, size = 0x8, scoped, tag = 'scoped memory for tpu_custom_call.1']
    #allocation6 [shape = 'u8[131072]{0}', space=vmem, size = 0x20000, scoped, tag = 'input window, operand 1']
    #allocation7 [shape = 's32[2]{0}', space=sflag, size = 0x8, scoped, tag = 'scoped memory for tpu_custom_call.1']
    #allocation8 [shape = 'u8[131072]{0}', space=vmem, size = 0x20000, scoped, tag = 'output window, operand 0']
    %7 = vsyncpa [#allocation4], 0
    %s8 = scalar_lea.sflag [#allocation4], 1
    %9 = vsyncpa %s8, 0
    %10 = vsyncpa [#allocation7], 0
    %s11 = scalar_lea.sflag [#allocation7], 1
    %12 = vsyncpa %s11, 0
    %13 = vsyncpa [#allocation5], 0
    %s14 = scalar_lea.sflag [#allocation5], 1
    %15 = vsyncpa %s14, 0
    loop: start=0, step=1, limit=14
    $region2: #{tpu_custom_call.1} parent=1 // loop_pre_header
      _
    $region3: #{tpu_custom_call.1} parent=1 // loop_header
      %s17 = sphi 0, %s21
      %p18 = scmp.ge.s32.totalorder %s17, 14
      %s24 = sphi 0, %s43
      %s25 = sphi 0, %s39
      %s26 = sphi 0, %s35
      %s27 = sphi 0, %s24
      %s28 = sphi 0, %s25
      %s29 = sphi 0, %s26
      %s30 = sphi 0, %s27
      %s31 = sphi 0, %s28
      %s32 = sphi 0, %s29
      %s48 = sphi 0, %s50
      %s51 = sphi 0, %s48
      %s52 = sphi 0, %s51
      %s68 = sphi 0, %s52
      %s76 = sphi 0, %s78
      %s79 = sphi 0, %s76
      %s80 = sphi 0, %s79
      %s96 = sphi 0, %s80
      %s104 = sphi 0, %s106
      %s107 = sphi 0, %s104
      %s108 = sphi 0, %s107
      %s124 = sphi 0, %s108
    $region4: #{tpu_custom_call.1} parent=1 // loop_header_branch
      %20 = sbr.rel (%p18) target = $region8
    $region5: #{tpu_custom_call.1} parent=1 // loop_body
      %s22 = ssub.s32 %s17, 1
      %s23 = ssub.s32 %s17, 2
      %s33 = sadd.s32 1, %s26
      %p34 = scmp.ge.s32.totalorder %s33, 2
      %s35 = scalar_select %p34, 0, %s33
      %s36 = sadd.s32 1, %s25
      %s37 = scalar_select %p34, %s36, %s25
      %p38 = scmp.ge.s32.totalorder %s37, 3
      %s39 = scalar_select %p38, 0, %s37
      %s40 = sadd.s32 1, %s24
      %s41 = scalar_select %p38, %s40, %s24
      %p42 = scmp.ge.s32.totalorder %s41, 2
      %s43 = scalar_select %p42, 0, %s41
      %s44 = ssub.s32 %s24, %s43
      %s45 = ssub.s32 %s26, %s35
      %s46 = sor.u32 %s44, %s45
      %p47 = scmp.eq.s32.totalorder %s46, 0
      %s49 = sadd.s32 %s48, 1
      %s50 = scalar_select %p47, %s48, %s49
      %p53 = pneg %p47
      %p54 = scmp.eq.s32.totalorder %s17, 11
      %p55 = por %p53, %p54
      %p56 = scmp.ne.s32.totalorder %s48, %s51
      %p57 = scmp.eq.s32.totalorder %s17, 0
      %p58 = por %p56, %p57
      %p59 = scmp.ne.s32.totalorder %s48, %s51
      %p60 = scmp.eq.s32.totalorder %s22, 11
      %p61 = por %p59, %p60
      %p62 = scmp.ne.s32.totalorder %s51, %s52
      %p63 = scmp.eq.s32.totalorder %s22, 0
      %p64 = por %p62, %p63
      %p65 = scmp.ne.s32.totalorder %s51, %s52
      %p66 = scmp.eq.s32.totalorder %s23, 11
      %p67 = por %p65, %p66
      %p69 = scmp.ne.s32.totalorder %s52, %s68
      %p70 = scmp.eq.s32.totalorder %s23, 0
      %p71 = por %p69, %p70
      %s72 = ssub.s32 %s26, %s35
      %s73 = ssub.s32 %s25, %s39
      %s74 = sor.u32 %s72, %s73
      %p75 = scmp.eq.s32.totalorder %s74, 0
      %s77 = sadd.s32 %s76, 1
      %s78 = scalar_select %p75, %s76, %s77
      %p81 = pneg %p75
      %p82 = scmp.eq.s32.totalorder %s17, 11
      %p83 = por %p81, %p82
      %p84 = scmp.ne.s32.totalorder %s76, %s79
      %p85 = scmp.eq.s32.totalorder %s17, 0
      %p86 = por %p84, %p85
      %p87 = scmp.ne.s32.totalorder %s76, %s79
      %p88 = scmp.eq.s32.totalorder %s22, 11
      %p89 = por %p87, %p88
      %p90 = scmp.ne.s32.totalorder %s79, %s80
      %p91 = scmp.eq.s32.totalorder %s22, 0
      %p92 = por %p90, %p91
      %p93 = scmp.ne.s32.totalorder %s79, %s80
      %p94 = scmp.eq.s32.totalorder %s23, 11
      %p95 = por %p93, %p94
      %p97 = scmp.ne.s32.totalorder %s80, %s96
      %p98 = scmp.eq.s32.totalorder %s23, 0
      %p99 = por %p97, %p98
      %s100 = ssub.s32 %s24, %s43
      %s101 = ssub.s32 %s25, %s39
      %s102 = sor.u32 %s100, %s101
      %p103 = scmp.eq.s32.totalorder %s102, 0
      %s105 = sadd.s32 %s104, 1
      %s106 = scalar_select %p103, %s104, %s105
      %p109 = pneg %p103
      %p110 = scmp.eq.s32.totalorder %s17, 11
      %p111 = por %p109, %p110
      %p112 = scmp.ne.s32.totalorder %s104, %s107
      %p113 = scmp.eq.s32.totalorder %s17, 0
      %p114 = por %p112, %p113
      %p115 = scmp.ne.s32.totalorder %s104, %s107
      %p116 = scmp.eq.s32.totalorder %s22, 11
      %p117 = por %p115, %p116
      %p118 = scmp.ne.s32.totalorder %s107, %s108
      %p119 = scmp.eq.s32.totalorder %s22, 0
      %p120 = por %p118, %p119
      %p121 = scmp.ne.s32.totalorder %s107, %s108
      %p122 = scmp.eq.s32.totalorder %s23, 11
      %p123 = por %p121, %p122
      %p125 = scmp.ne.s32.totalorder %s108, %s124
      %p126 = scmp.eq.s32.totalorder %s23, 0
      %p127 = por %p125, %p126
      %p128 = scmp.le.s32.totalorder 1, %s17
      %p129 = scmp.lt.s32.totalorder %s17, 13
      %p130 = pnand %p128, %p129
      %p131 = pneg %p130
      // Predicated region
      $region9: #{tpu_custom_call.1} parent=5 // pred_check
        _
      $region10: #{tpu_custom_call.1} parent=5 // pred_check_branch
        %133 = sbr.rel (%p130) target = $region12
      $region11: #{tpu_custom_call.1} parent=5 // pred_region
        %s134 = ssub.s32 %s17, 1
      $region12: #{tpu_custom_call.1} parent=5 // pred_fallthru
        _
      %p135 = scmp.lt.s32.totalorder %s17, 12
      // Predicated region
      $region13: #{tpu_custom_call.1} parent=5 // pred_check
        %p136 = pneg %p135
      $region14: #{tpu_custom_call.1} parent=5 // pred_check_branch
        %138 = sbr.rel (%p136) target = $region16
      $region15: #{tpu_custom_call.1} parent=5 // pred_region
        // Predicated region
        $region17: #{tpu_custom_call.1} parent=15 // pred_check
          %p139 = pneg %p58
        $region18: #{tpu_custom_call.1} parent=15 // pred_check_branch
          %141 = sbr.rel (%p139) target = $region20
        $region19: #{tpu_custom_call.1} parent=15 // pred_region
          %s142 = sand.u32 %s48, 1
          %s143 = scalar_lea.sflag [#allocation4], %s142
          %s144 = sand.u32 %s48, 1
          %s145 = smul.addr %s144, 128
          %s146 = scalar_lea.vmem [#allocation3], %s145
          %s147 = smul.u32 16, %s24
          %s149 = ssub.s32 2048, 2048
          %150 = vsyncadd %s143, %s149
          %s151 = smul.addr %s147, 2
          %s152 = sadd.s32 %s26, %s151
          %s153 = smul.addr %s152, 128
          %s154 = scalar_lea.hbm %s0, %s153
          %s155 = sshll.u32 %s146, 4
          %s156 = int_to_ptr.vmem [resolvable:$true] %s155
          %161 = dma.hbm_to_vmem [thread:$0]  %s154, 2048, %s156, %s143, 256, 128, 8
        $region20: #{tpu_custom_call.1} parent=15 // pred_fallthru
          _
        // Predicated region
        $region21: #{tpu_custom_call.1} parent=15 // pred_check
          %p162 = pneg %p86
        $region22: #{tpu_custom_call.1} parent=15 // pred_check_branch
          %164 = sbr.rel (%p162) target = $region24
        $region23: #{tpu_custom_call.1} parent=15 // pred_region
          %s165 = sand.u32 %s76, 1
          %s166 = scalar_lea.sflag [#allocation7], %s165
          %s167 = sand.u32 %s76, 1
          %s168 = smul.addr %s167, 128
          %s169 = scalar_lea.vmem [#allocation6], %s168
          %s170 = smul.u32 16, %s26
          %s172 = ssub.s32 2048, 2048
          %173 = vsyncadd %s166, %s172
          %s174 = smul.addr %s170, 3
          %s175 = sadd.s32 %s25, %s174
          %s176 = smul.addr %s175, 128
          %s177 = scalar_lea.hbm %s1, %s176
          %s178 = sshll.u32 %s169, 4
          %s179 = int_to_ptr.vmem [resolvable:$true] %s178
          %184 = dma.hbm_to_vmem [thread:$0]  %s177, 2048, %s179, %s166, 384, 128, 8
        $region24: #{tpu_custom_call.1} parent=15 // pred_fallthru
          _
      $region16: #{tpu_custom_call.1} parent=5 // pred_fallthru
        _
      %p185 = scmp.le.s32.totalorder 1, %s17
      %p186 = scmp.lt.s32.totalorder %s17, 13
      %p187 = pnand %p185, %p186
      %p188 = pneg %p187
      // Predicated region
      $region25: #{tpu_custom_call.1} parent=5 // pred_check
        _
      $region26: #{tpu_custom_call.1} parent=5 // pred_check_branch
        %190 = sbr.rel (%p187) target = $region28
      $region27: #{tpu_custom_call.1} parent=5 // pred_region
        %s191 = ssub.s32 %s17, 1
        %s192 = sand.u32 %s51, 1
        %s193 = scalar_lea.sflag [#allocation4], %s192
        %s194 = sand.u32 %s51, 1
        %s195 = smul.addr %s194, 128
        %s196 = scalar_lea.vmem [#allocation3], %s195
        // Predicated region
        $region29: #{tpu_custom_call.1} parent=27 // pred_check
          %p197 = pneg %p64
        $region30: #{tpu_custom_call.1} parent=27 // pred_check_branch
          %199 = sbr.rel (%p197) target = $region32
        $region31: #{tpu_custom_call.1} parent=27 // pred_region
          %200 = dma.done %s193, 2048
        $region32: #{tpu_custom_call.1} parent=27 // pred_fallthru
          _
        %s201 = sand.u32 %s79, 1
        %s202 = scalar_lea.sflag [#allocation7], %s201
        %s203 = sand.u32 %s79, 1
        %s204 = smul.addr %s203, 128
        %s205 = scalar_lea.vmem [#allocation6], %s204
        // Predicated region
        $region33: #{tpu_custom_call.1} parent=27 // pred_check
          %p206 = pneg %p92
        $region34: #{tpu_custom_call.1} parent=27 // pred_check_branch
          %208 = sbr.rel (%p206) target = $region36
        $region35: #{tpu_custom_call.1} parent=27 // pred_region
          %209 = dma.done %s202, 2048
        $region36: #{tpu_custom_call.1} parent=27 // pred_fallthru
          _
        %s210 = sand.u32 %s51, 1
        %s211 = scalar_lea.sflag [#allocation4], %s210
        %s212 = sand.u32 %s51, 1
        %s213 = smul.addr %s212, 128
        %s214 = scalar_lea.vmem [#allocation3], %s213
        %p215 = pneg %p64
        %p216 = pneg %p61
        %s217 = sand.u32 %s79, 1
        %s218 = scalar_lea.sflag [#allocation7], %s217
        %s219 = sand.u32 %s79, 1
        %s220 = smul.addr %s219, 128
        %s221 = scalar_lea.vmem [#allocation6], %s220
        %p222 = pneg %p92
        %p223 = pneg %p89
        %p224 = pneg %p120
        %p225 = pneg %p117
        %s226 = sand.u32 %s107, 1
        %s227 = scalar_lea.sflag [#allocation5], %s226
        %s228 = sand.u32 %s107, 1
        %s229 = smul.addr %s228, 128
        %s230 = scalar_lea.vmem [#allocation8], %s229
        %s231 = smul.u32 16, %s27
        %s232 = smul.u32 16, %s29
        %s233 = smul.u32 16, %s27
        %p234 = scmp.eq.s32.totalorder %s29, 0
        // Predicated region
        $region37: #{tpu_custom_call.1} parent=27 // pred_check
          %p235 = pneg %p234
        $region38: #{tpu_custom_call.1} parent=27 // pred_check_branch
          %237 = sbr.rel (%p235) target = $region40
        $region39: #{tpu_custom_call.1} parent=27 // pred_region
          %238 = vst [vmem:[#allocation2] sm:$0xff] 0.0
          %239 = vst [vmem:[#allocation2 + $0x8] sm:$0xff] 0.0
          %240 = vst [vmem:[#allocation2 + $0x10] sm:$0xff] 0.0
          %241 = vst [vmem:[#allocation2 + $0x18] sm:$0xff] 0.0
          %242 = vst [vmem:[#allocation2 + $0x20] sm:$0xff] 0.0
          %243 = vst [vmem:[#allocation2 + $0x28] sm:$0xff] 0.0
          %244 = vst [vmem:[#allocation2 + $0x30] sm:$0xff] 0.0
          %245 = vst [vmem:[#allocation2 + $0x38] sm:$0xff] 0.0
          %246 = vst [vmem:[#allocation2 + $0x40] sm:$0xff] 0.0
          %247 = vst [vmem:[#allocation2 + $0x48] sm:$0xff] 0.0
          %248 = vst [vmem:[#allocation2 + $0x50] sm:$0xff] 0.0
          %249 = vst [vmem:[#allocation2 + $0x58] sm:$0xff] 0.0
          %250 = vst [vmem:[#allocation2 + $0x60] sm:$0xff] 0.0
          %251 = vst [vmem:[#allocation2 + $0x68] sm:$0xff] 0.0
          %252 = vst [vmem:[#allocation2 + $0x70] sm:$0xff] 0.0
          %253 = vst [vmem:[#allocation2 + $0x78] sm:$0xff] 0.0
        $region40: #{tpu_custom_call.1} parent=27 // pred_fallthru
          _
        %v254 = vld [vmem:[#allocation2] sm:$0xff]
        %v255 = vld [vmem:[#allocation2 + $0x8] sm:$0xff]
        %v256 = vld [vmem:[#allocation2 + $0x10] sm:$0xff]
        %v257 = vld [vmem:[#allocation2 + $0x18] sm:$0xff]
        %v258 = vld [vmem:[#allocation2 + $0x20] sm:$0xff]
        %v259 = vld [vmem:[#allocation2 + $0x28] sm:$0xff]
        %v260 = vld [vmem:[#allocation2 + $0x30] sm:$0xff]
        %v261 = vld [vmem:[#allocation2 + $0x38] sm:$0xff]
        %v262 = vld [vmem:[#allocation2 + $0x40] sm:$0xff]
        %v263 = vld [vmem:[#allocation2 + $0x48] sm:$0xff]
        %v264 = vld [vmem:[#allocation2 + $0x50] sm:$0xff]
        %v265 = vld [vmem:[#allocation2 + $0x58] sm:$0xff]
        %v266 = vld [vmem:[#allocation2 + $0x60] sm:$0xff]
        %v267 = vld [vmem:[#allocation2 + $0x68] sm:$0xff]
        %v268 = vld [vmem:[#allocation2 + $0x70] sm:$0xff]
        %v269 = vld [vmem:[#allocation2 + $0x78] sm:$0xff]
        %v270 = vld [vmem:[%s196] sm:$0xff]
        %v271 = vld [vmem:[%s196 + $0x8] sm:$0xff]
        %v272 = vld [vmem:[%s196 + $0x10] sm:$0xff]
        %v273 = vld [vmem:[%s196 + $0x18] sm:$0xff]
        %v274 = vld [vmem:[%s196 + $0x20] sm:$0xff]
        %v275 = vld [vmem:[%s196 + $0x28] sm:$0xff]
        %v276 = vld [vmem:[%s196 + $0x30] sm:$0xff]
        %v277 = vld [vmem:[%s196 + $0x38] sm:$0xff]
        %v278 = vld [vmem:[%s196 + $0x40] sm:$0xff]
        %v279 = vld [vmem:[%s196 + $0x48] sm:$0xff]
        %v280 = vld [vmem:[%s196 + $0x50] sm:$0xff]
        %v281 = vld [vmem:[%s196 + $0x58] sm:$0xff]
        %v282 = vld [vmem:[%s196 + $0x60] sm:$0xff]
        %v283 = vld [vmem:[%s196 + $0x68] sm:$0xff]
        %v284 = vld [vmem:[%s196 + $0x70] sm:$0xff]
        %v285 = vld [vmem:[%s196 + $0x78] sm:$0xff]
        %v286 = vld [vmem:[%s205] sm:$0xff]
        %v287 = vld [vmem:[%s205 + $0x8] sm:$0xff]
        %v288 = vld [vmem:[%s205 + $0x10] sm:$0xff]
        %v289 = vld [vmem:[%s205 + $0x18] sm:$0xff]
        %v290 = vld [vmem:[%s205 + $0x20] sm:$0xff]
        %v291 = vld [vmem:[%s205 + $0x28] sm:$0xff]
        %v292 = vld [vmem:[%s205 + $0x30] sm:$0xff]
        %v293 = vld [vmem:[%s205 + $0x38] sm:$0xff]
        %v294 = vld [vmem:[%s205 + $0x40] sm:$0xff]
        %v295 = vld [vmem:[%s205 + $0x48] sm:$0xff]
        %v296 = vld [vmem:[%s205 + $0x50] sm:$0xff]
        %v297 = vld [vmem:[%s205 + $0x58] sm:$0xff]
        %v298 = vld [vmem:[%s205 + $0x60] sm:$0xff]
        %v299 = vld [vmem:[%s205 + $0x68] sm:$0xff]
        %v300 = vld [vmem:[%s205 + $0x70] sm:$0xff]
        %v301 = vld [vmem:[%s205 + $0x78] sm:$0xff]
        %302 = vmatprep.subr.mxu0 0.0
        %303 = vmatpush1.msra.mxu0 %v286
        %304 = vmatprep.subr.mxu0 0.0
        %305 = vmatpush1.msra.mxu0 %v287
        %306 = vmatprep.subr.mxu0 0.0
        %307 = vmatpush1.msra.mxu0 %v288
        %308 = vmatprep.subr.mxu0 0.0
        %309 = vmatpush1.msra.mxu0 %v289
        %310 = vmatprep.subr.mxu0 0.0
        %311 = vmatpush1.msra.mxu0 %v290
        %312 = vmatprep.subr.mxu0 0.0
        %313 = vmatpush1.msra.mxu0 %v291
        %314 = vmatprep.subr.mxu0 0.0
        %315 = vmatpush1.msra.mxu0 %v292
        %316 = vmatprep.subr.mxu0 0.0
        %317 = vmatpush1.msra.mxu0 %v293
        %318 = vmatprep.subr.mxu0 0.0
        %319 = vmatpush1.msra.mxu0 %v294
        %320 = vmatprep.subr.mxu0 0.0
        %321 = vmatpush1.msra.mxu0 %v295
        %322 = vmatprep.subr.mxu0 0.0
        %323 = vmatpush1.msra.mxu0 %v296
        %324 = vmatprep.subr.mxu0 0.0
        %325 = vmatpush1.msra.mxu0 %v297
        %326 = vmatprep.subr.mxu0 0.0
        %327 = vmatpush1.msra.mxu0 %v298
        %328 = vmatprep.subr.mxu0 0.0
        %329 = vmatpush1.msra.mxu0 %v299
        %330 = vmatprep.subr.mxu0 0.0
        %331 = vmatpush1.msra.mxu0 %v300
        %332 = vmatprep.subr.mxu0 0.0
        %333 = vmatpush1.msra.mxu0 %v301
        %334 = vmatprep.subr.mxu0 0.0
        %335 = vmatpush1.msra.mxu0 0.0
        %336 = vmatprep.subr.mxu0 0.0
        %337 = vmatpush1.msra.mxu0 0.0
        %338 = vmatprep.subr.mxu0 0.0
        %339 = vmatpush1.msra.mxu0 0.0
        %340 = vmatprep.subr.mxu0 0.0
        %341 = vmatpush1.msra.mxu0 0.0
        %342 = vmatprep.subr.mxu0 0.0
        %343 = vmatpush1.msra.mxu0 0.0
        %344 = vmatprep.subr.mxu0 0.0
        %345 = vmatpush1.msra.mxu0 0.0
        %346 = vmatprep.subr.mxu0 0.0
        %347 = vmatpush1.msra.mxu0 0.0
        %348 = vmatprep.subr.mxu0 0.0
        %349 = vmatpush1.msra.mxu0 0.0
        %350 = vmatprep.subr.mxu0 0.0
        %351 = vmatpush1.msra.mxu0 0.0
        %352 = vmatprep.subr.mxu0 0.0
        %353 = vmatpush1.msra.mxu0 0.0
        %354 = vmatprep.subr.mxu0 0.0
        %355 = vmatpush1.msra.mxu0 0.0
        %356 = vmatprep.subr.mxu0 0.0
        %357 = vmatpush1.msra.mxu0 0.0
        %358 = vmatprep.subr.mxu0 0.0
        %359 = vmatpush1.msra.mxu0 0.0
        %360 = vmatprep.subr.mxu0 0.0
        %361 = vmatpush1.msra.mxu0 0.0
        %362 = vmatprep.subr.mxu0 0.0
        %363 = vmatpush1.msra.mxu0 0.0
        %364 = vmatprep.subr.mxu0 0.0
        %365 = vmatpush1.msra.mxu0 0.0
        %366 = vmatprep.mubr.f32.mxu0 0.0
        %367 = vmatmul.mubr.f32.gmra.mrb[0].mxu0 %v270
        %v368 = vpop.f32.mrb[0].mxu0
        %v369 = vadd.f32 0.0, %v368
        %v370 = vpop.f32.mrb[0].mxu0
        %371 = vmatprep.mubr.f32.mxu0 0.0
        %372 = vmatmul.mubr.f32.gmra.mrb[0].mxu0 %v271
        %v373 = vpop.f32.mrb[0].mxu0
        %v374 = vadd.f32 0.0, %v373
        %v375 = vpop.f32.mrb[0].mxu0
        %376 = vmatprep.mubr.f32.mxu0 0.0
        %377 = vmatmul.mubr.f32.gmra.mrb[0].mxu0 %v272
        %v378 = vpop.f32.mrb[0].mxu0
        %v379 = vadd.f32 0.0, %v378
        %v380 = vpop.f32.mrb[0].mxu0
        %381 = vmatprep.mubr.f32.mxu0 0.0
        %382 = vmatmul.mubr.f32.gmra.mrb[0].mxu0 %v273
        %v383 = vpop.f32.mrb[0].mxu0
        %v384 = vadd.f32 0.0, %v383
        %v385 = vpop.f32.mrb[0].mxu0
        %386 = vmatprep.mubr.f32.mxu0 0.0
        %387 = vmatmul.mubr.f32.gmra.mrb[0].mxu0 %v274
        %v388 = vpop.f32.mrb[0].mxu0
        %v389 = vadd.f32 0.0, %v388
        %v390 = vpop.f32.mrb[0].mxu0
        %391 = vmatprep.mubr.f32.mxu0 0.0
        %392 = vmatmul.mubr.f32.gmra.mrb[0].mxu0 %v275
        %v393 = vpop.f32.mrb[0].mxu0
        %v394 = vadd.f32 0.0, %v393
        %v395 = vpop.f32.mrb[0].mxu0
        %396 = vmatprep.mubr.f32.mxu0 0.0
        %397 = vmatmul.mubr.f32.gmra.mrb[0].mxu0 %v276
        %v398 = vpop.f32.mrb[0].mxu0
        %v399 = vadd.f32 0.0, %v398
        %v400 = vpop.f32.mrb[0].mxu0
        %401 = vmatprep.mubr.f32.mxu0 0.0
        %402 = vmatmul.mubr.f32.gmra.mrb[0].mxu0 %v277
        %v403 = vpop.f32.mrb[0].mxu0
        %v404 = vadd.f32 0.0, %v403
        %v405 = vpop.f32.mrb[0].mxu0
        %406 = vmatprep.mubr.f32.mxu0 0.0
        %407 = vmatmul.mubr.f32.gmra.mrb[0].mxu0 %v278
        %v408 = vpop.f32.mrb[0].mxu0
        %v409 = vadd.f32 0.0, %v408
        %v410 = vpop.f32.mrb[0].mxu0
        %411 = vmatprep.mubr.f32.mxu0 0.0
        %412 = vmatmul.mubr.f32.gmra.mrb[0].mxu0 %v279
        %v413 = vpop.f32.mrb[0].mxu0
        %v414 = vadd.f32 0.0, %v413
        %v415 = vpop.f32.mrb[0].mxu0
        %416 = vmatprep.mubr.f32.mxu0 0.0
        %417 = vmatmul.mubr.f32.gmra.mrb[0].mxu0 %v280
        %v418 = vpop.f32.mrb[0].mxu0
        %v419 = vadd.f32 0.0, %v418
        %v420 = vpop.f32.mrb[0].mxu0
        %421 = vmatprep.mubr.f32.mxu0 0.0
        %422 = vmatmul.mubr.f32.gmra.mrb[0].mxu0 %v281
        %v423 = vpop.f32.mrb[0].mxu0
        %v424 = vadd.f32 0.0, %v423
        %v425 = vpop.f32.mrb[0].mxu0
        %426 = vmatprep.mubr.f32.mxu0 0.0
        %427 = vmatmul.mubr.f32.gmra.mrb[0].mxu0 %v282
        %v428 = vpop.f32.mrb[0].mxu0
        %v429 = vadd.f32 0.0, %v428
        %v430 = vpop.f32.mrb[0].mxu0
        %431 = vmatprep.mubr.f32.mxu0 0.0
        %432 = vmatmul.mubr.f32.gmra.mrb[0].mxu0 %v283
        %v433 = vpop.f32.mrb[0].mxu0
        %v434 = vadd.f32 0.0, %v433
        %v435 = vpop.f32.mrb[0].mxu0
        %436 = vmatprep.mubr.f32.mxu0 0.0
        %437 = vmatmul.mubr.f32.gmra.mrb[0].mxu0 %v284
        %v438 = vpop.f32.mrb[0].mxu0
        %v439 = vadd.f32 0.0, %v438
        %v440 = vpop.f32.mrb[0].mxu0
        %441 = vmatprep.mubr.f32.mxu0 0.0
        %442 = vmatmul.mubr.f32.gmra.mrb[0].mxu0 %v285
        %v443 = vpop.f32.mrb[0].mxu0
        %v444 = vadd.f32 0.0, %v443
        %v445 = vpop.f32.mrb[0].mxu0
        %446 = vdwg.mxu0
        %v447 = vadd.f32 %v254, %v369
        %v448 = vadd.f32 %v255, %v374
        %v449 = vadd.f32 %v256, %v379
        %v450 = vadd.f32 %v257, %v384
        %v451 = vadd.f32 %v258, %v389
        %v452 = vadd.f32 %v259, %v394
        %v453 = vadd.f32 %v260, %v399
        %v454 = vadd.f32 %v261, %v404
        %v455 = vadd.f32 %v262, %v409
        %v456 = vadd.f32 %v263, %v414
        %v457 = vadd.f32 %v264, %v419
        %v458 = vadd.f32 %v265, %v424
        %v459 = vadd.f32 %v266, %v429
        %v460 = vadd.f32 %v267, %v434
        %v461 = vadd.f32 %v268, %v439
        %v462 = vadd.f32 %v269, %v444
        %463 = vst [vmem:[#allocation2] sm:$0xff] %v447
        %464 = vst [vmem:[#allocation2 + $0x8] sm:$0xff] %v448
        %465 = vst [vmem:[#allocation2 + $0x10] sm:$0xff] %v449
        %466 = vst [vmem:[#allocation2 + $0x18] sm:$0xff] %v450
        %467 = vst [vmem:[#allocation2 + $0x20] sm:$0xff] %v451
        %468 = vst [vmem:[#allocation2 + $0x28] sm:$0xff] %v452
        %469 = vst [vmem:[#allocation2 + $0x30] sm:$0xff] %v453
        %470 = vst [vmem:[#allocation2 + $0x38] sm:$0xff] %v454
        %471 = vst [vmem:[#allocation2 + $0x40] sm:$0xff] %v455
        %472 = vst [vmem:[#allocation2 + $0x48] sm:$0xff] %v456
        %473 = vst [vmem:[#allocation2 + $0x50] sm:$0xff] %v457
        %474 = vst [vmem:[#allocation2 + $0x58] sm:$0xff] %v458
        %475 = vst [vmem:[#allocation2 + $0x60] sm:$0xff] %v459
        %476 = vst [vmem:[#allocation2 + $0x68] sm:$0xff] %v460
        %477 = vst [vmem:[#allocation2 + $0x70] sm:$0xff] %v461
        %478 = vst [vmem:[#allocation2 + $0x78] sm:$0xff] %v462
        %p479 = scmp.eq.s32.totalorder %s29, 1
        // Predicated region
        $region41: #{tpu_custom_call.1} parent=27 // pred_check
          %p480 = pneg %p479
        $region42: #{tpu_custom_call.1} parent=27 // pred_check_branch
          %482 = sbr.rel (%p480) target = $region44
        $region43: #{tpu_custom_call.1} parent=27 // pred_region
          %v483 = vld [vmem:[#allocation2] sm:$0xff]
          %v484 = vld [vmem:[#allocation2 + $0x8] sm:$0xff]
          %v485 = vld [vmem:[#allocation2 + $0x10] sm:$0xff]
          %v486 = vld [vmem:[#allocation2 + $0x18] sm:$0xff]
          %v487 = vld [vmem:[#allocation2 + $0x20] sm:$0xff]
          %v488 = vld [vmem:[#allocation2 + $0x28] sm:$0xff]
          %v489 = vld [vmem:[#allocation2 + $0x30] sm:$0xff]
          %v490 = vld [vmem:[#allocation2 + $0x38] sm:$0xff]
          %v491 = vld [vmem:[#allocation2 + $0x40] sm:$0xff]
          %v492 = vld [vmem:[#allocation2 + $0x48] sm:$0xff]
          %v493 = vld [vmem:[#allocation2 + $0x50] sm:$0xff]
          %v494 = vld [vmem:[#allocation2 + $0x58] sm:$0xff]
          %v495 = vld [vmem:[#allocation2 + $0x60] sm:$0xff]
          %v496 = vld [vmem:[#allocation2 + $0x68] sm:$0xff]
          %v497 = vld [vmem:[#allocation2 + $0x70] sm:$0xff]
          %v498 = vld [vmem:[#allocation2 + $0x78] sm:$0xff]
          %499 = vst [vmem:[%s230] sm:$0xff] %v483
          %500 = vst [vmem:[%s230 + $0x8] sm:$0xff] %v484
          %501 = vst [vmem:[%s230 + $0x10] sm:$0xff] %v485
          %502 = vst [vmem:[%s230 + $0x18] sm:$0xff] %v486
          %503 = vst [vmem:[%s230 + $0x20] sm:$0xff] %v487
          %504 = vst [vmem:[%s230 + $0x28] sm:$0xff] %v488
          %505 = vst [vmem:[%s230 + $0x30] sm:$0xff] %v489
          %506 = vst [vmem:[%s230 + $0x38] sm:$0xff] %v490
          %507 = vst [vmem:[%s230 + $0x40] sm:$0xff] %v491
          %508 = vst [vmem:[%s230 + $0x48] sm:$0xff] %v492
          %509 = vst [vmem:[%s230 + $0x50] sm:$0xff] %v493
          %510 = vst [vmem:[%s230 + $0x58] sm:$0xff] %v494
          %511 = vst [vmem:[%s230 + $0x60] sm:$0xff] %v495
          %512 = vst [vmem:[%s230 + $0x68] sm:$0xff] %v496
          %513 = vst [vmem:[%s230 + $0x70] sm:$0xff] %v497
          %514 = vst [vmem:[%s230 + $0x78] sm:$0xff] %v498
        $region44: #{tpu_custom_call.1} parent=27 // pred_fallthru
          _
        %s515 = sand.u32 %s107, 1
        %s516 = scalar_lea.sflag [#allocation5], %s515
        %s517 = sand.u32 %s107, 1
        %s518 = smul.addr %s517, 128
        %s519 = scalar_lea.vmem [#allocation8], %s518
        // Predicated region
        $region45: #{tpu_custom_call.1} parent=27 // pred_check
          %p520 = pneg %p117
        $region46: #{tpu_custom_call.1} parent=27 // pred_check_branch
          %522 = sbr.rel (%p520) target = $region48
        $region47: #{tpu_custom_call.1} parent=27 // pred_region
          %s523 = smul.u32 16, %s27
          %s525 = ssub.s32 2048, 2048
          %526 = vsyncadd %s516, %s525
          %s527 = smul.addr %s523, 3
          %s528 = sadd.s32 %s28, %s527
          %s529 = smul.addr %s528, 128
          %s530 = scalar_lea.hbm %s2, %s529
          %s531 = sshll.u32 %s519, 4
          %s532 = int_to_ptr.vmem [resolvable:$true] %s531
          %537 = dma.vmem_to_hbm [thread:$0]  %s532, 2048, %s530, %s516, 128, 384, 8
        $region48: #{tpu_custom_call.1} parent=27 // pred_fallthru
          _
      $region28: #{tpu_custom_call.1} parent=5 // pred_fallthru
        _
      %p538 = scmp.le.s32.totalorder 2, %s17
      // Predicated region
      $region49: #{tpu_custom_call.1} parent=5 // pred_check
        %p539 = pneg %p538
      $region50: #{tpu_custom_call.1} parent=5 // pred_check_branch
        %541 = sbr.rel (%p539) target = $region52
      $region51: #{tpu_custom_call.1} parent=5 // pred_region
        %s542 = ssub.s32 %s17, 2
        // Predicated region
        $region53: #{tpu_custom_call.1} parent=51 // pred_check
          %p543 = pneg %p123
        $region54: #{tpu_custom_call.1} parent=51 // pred_check_branch
          %545 = sbr.rel (%p543) target = $region56
        $region55: #{tpu_custom_call.1} parent=51 // pred_region
          %s546 = sand.u32 %s108, 1
          %s547 = scalar_lea.sflag [#allocation5], %s546
          %s548 = sand.u32 %s108, 1
          %s549 = smul.addr %s548, 128
          %s550 = scalar_lea.vmem [#allocation8], %s549
          %551 = dma.done %s547, 2048
        $region56: #{tpu_custom_call.1} parent=51 // pred_fallthru
          _
      $region52: #{tpu_custom_call.1} parent=5 // pred_fallthru
        _
    $region6: #{tpu_custom_call.1} parent=1 // loop_footer
      %s21 = sadd.s32 1, %s17
    $region7: #{tpu_custom_call.1} parent=1 // loop_footer_branch
      %16 = sbr.rel target = $region3
    $region8: #{tpu_custom_call.1} parent=1 // loop_exit
      _
    %552 = vsyncpa [#allocation4], 1
    %s553 = scalar_lea.sflag [#allocation4], 1
    %554 = vsyncpa %s553, 1
    %555 = vsyncpa [#allocation7], 1
    %s556 = scalar_lea.sflag [#allocation7], 1
    %557 = vsyncpa %s556, 1
    %558 = vsyncpa [#allocation5], 1
    %s559 = scalar_lea.sflag [#allocation5], 1
    %560 = vsyncpa %s559, 1

</llo_original>
